<compile_context>
chip_gen: v7x
topology: tpu7x:2x2x1
jax: 0.10.0
libtpu: 0.0.40
codegen_flags: <defaults>
</compile_context>

<pallas_src>
import functools

import numpy as np
import jax
import jax.numpy as jnp
from jax import lax
from jax.experimental import pallas as pl
from jax.experimental.pallas import tpu as pltpu

_LANES = 128


def _sublane_multiple(dtype) -> int:
    """Packed sublane multiple: f32 -> 8, bf16/f16 -> 16, int8/bool -> 32."""
    itemsize = jnp.dtype(dtype).itemsize
    return 8 * max(1, 4 // max(1, itemsize))


# ---------------------------------------------------------------------------
# Kernel: per-(image, pixel-half) partial sums, accumulated over pixel tiles.
#   pred_ref / tgt_ref : (1, TR, 128) tile of one image's flattened pixels
#   iand_ref / both_ref: (1, 1, 1, 1) per-(image, half) outputs, written once
#   iand_acc / both_acc: (8, 128) VMEM scratch accumulators (VALU-only adds)
# ---------------------------------------------------------------------------
def _iou_sums_kernel(pred_ref, tgt_ref, iand_ref, both_ref, iand_acc, both_acc,
                     *, rows, tiles_per_half, needs_mask):
    k = pl.program_id(2)

    @pl.when(k == 0)
    def _():
        iand_acc[...] = jnp.zeros_like(iand_acc)
        both_acc[...] = jnp.zeros_like(both_acc)

    tr = pred_ref.shape[1]
    p = pred_ref[0].astype(jnp.float32)   # (tr, 128)
    t = tgt_ref[0].astype(jnp.float32)

    if needs_mask:
        # Zero out rows past the true pixel extent (the padded part of a
        # boundary block is unspecified data and MUST not reach the sums).
        h = pl.program_id(1)
        g = h * tiles_per_half + k                       # global tile index
        valid = rows - g * tr                            # rows valid in tile
        row_ids = lax.broadcasted_iota(jnp.int32, (tr, _LANES), 0)
        keep = row_ids < valid
        p = jnp.where(keep, p, 0.0)
        t = jnp.where(keep, t, 0.0)

    # Reduce the tile into a single (8, 128) vreg with pure VALU adds (the
    # reshape is along (8, 128) vreg boundaries, so it is free).
    pt = (p * t).reshape(tr // 8, 8, _LANES).sum(axis=0)
    ps = (p + t).reshape(tr // 8, 8, _LANES).sum(axis=0)
    iand_acc[...] += pt
    both_acc[...] += ps

    @pl.when(k == tiles_per_half - 1)
    def _():
        # Cross-lane/sublane reduce + masked scalar store only once per
        # (image, half), not per tile.
        iand_ref[...] = jnp.zeros_like(iand_ref) + jnp.sum(iand_acc[...])
        both_ref[...] = jnp.zeros_like(both_ref) + jnp.sum(both_acc[...])


# ---------------------------------------------------------------------------
# IOU.forward
# ---------------------------------------------------------------------------
@functools.partial(jax.jit, static_argnames=("size_average", "tile_rows"))
def iou_loss(pred, target, size_average=True, tile_rows=2048):
    # Faithful to the torch reference: _iou always divides by the batch size,
    # so size_average is unused.
    del size_average
    assert pred.shape == target.shape, "pred and target must have the same shape"

    n = pred.shape[0]
    p = int(np.prod(pred.shape[1:]))
    rows = -(-p // _LANES)                 # cdiv(p, 128)
    p_pad = rows * _LANES

    def to_lane_dense(x):
        x2 = x.reshape(n, p)
        if p_pad > p:
            # Only when pixels-per-image isn't a multiple of 128; pads at most
            # 127 zeros per image (zeros don't change the sums).
            x2 = jnp.pad(x2, ((0, 0), (0, p_pad - p)))
        return x2.reshape(n, rows, _LANES)

    pred3 = to_lane_dense(pred)
    tgt3 = to_lane_dense(target)

    # Tile rows: multiple of the (dtype-dependent) packed sublane count, no
    # bigger than the image; rows is NOT padded up to a multiple of the tile.
    mult = max(_sublane_multiple(pred.dtype), _sublane_multiple(target.dtype))
    tr = min(int(tile_rows), rows)
    tr = max(mult, (tr // mult) * mult)
    num_tiles = -(-rows // tr)

    # Split the pixel-tile axis into two parallel halves so v7x's second
    # TensorCore has work even at batch size 1 (no effect on v5e/v6e).
    split = 2 if num_tiles >= 2 else 1
    tiles_per_half = -(-num_tiles // split)
    needs_mask = (split * tiles_per_half * tr) != rows

    def tile_idx(i, h, k):
        g = h * tiles_per_half + k
        # Clamp fully-out-of-bounds tiles (odd tile counts) onto the last real
        # tile; the kernel masks their contribution to zero.
        return (i, jnp.minimum(g, num_tiles - 1), 0)

    tile_spec = pl.BlockSpec((1, tr, _LANES), tile_idx)
    scalar_spec = pl.BlockSpec((1, 1, 1, 1), lambda i, h, k: (i, h, 0, 0))
    scalar_out = jax.ShapeDtypeStruct((n, split, 1, 1), jnp.float32)

    kernel = functools.partial(
        _iou_sums_kernel, rows=rows, tiles_per_half=tiles_per_half,
        needs_mask=needs_mask)

    iand, both = pl.pallas_call(
        kernel,
        out_shape=(scalar_out, scalar_out),
        grid=(n, split, tiles_per_half),
        in_specs=[tile_spec, tile_spec],
        out_specs=(scalar_spec, scalar_spec),
        scratch_shapes=[pltpu.VMEM((8, _LANES), jnp.float32),
                        pltpu.VMEM((8, _LANES), jnp.float32)],
        compiler_params=pltpu.CompilerParams(
            dimension_semantics=("parallel", "parallel", "arbitrary")),
    )(pred3, tgt3)

    iand = jnp.sum(iand[:, :, 0, 0], axis=1)     # (n,)  sum(pred * target)
    both = jnp.sum(both[:, :, 0, 0], axis=1)     # (n,)  sum(pred) + sum(target)
    ior = both - iand
    iou = iand / ior                             # faithful: no guard if Ior == 0
    return jnp.mean(1.0 - iou)                   # sum_i (1 - IoU_i) / b


# Pure-JAX reference for validation.
def _iou_ref(pred, target):
    axes = tuple(range(1, pred.ndim))
    pred = pred.astype(jnp.float32)
    target = target.astype(jnp.float32)
    iand = jnp.sum(pred * target, axis=axes)
    ior = jnp.sum(pred, axis=axes) + jnp.sum(target, axis=axes) - iand
    return jnp.mean(1.0 - iand / ior)


if __name__ == "__main__":
    key = jax.random.PRNGKey(0)
    k1, k2, k3, k4 = jax.random.split(key, 4)

    # Case 1: canonical small shape (single tile, no masking).
    N, C, H, W = 2, 4, 16, 16
    pred = jax.nn.sigmoid(jax.random.normal(k1, (N, C, H, W), dtype=jnp.float32))
    target = jax.random.bernoulli(k2, 0.4, (N, C, H, W)).astype(jnp.float32)
    loss = iou_loss(pred, target)
    jax.block_until_ready(loss)
    ref = _iou_ref(pred, target)
    assert np.isfinite(np.asarray(loss)), f"non-finite loss: {loss}"
    assert np.allclose(np.asarray(loss), np.asarray(ref), rtol=1e-5, atol=1e-6), (loss, ref)

    # Case 2: rows not a multiple of the tile -> exercises the in-kernel tail
    # mask and the 2-way pixel split (no wrapper padding: 48*48 % 128 == 0).
    pred2 = jax.nn.sigmoid(jax.random.normal(k3, (2, 1, 48, 48), dtype=jnp.float32))
    target2 = jax.random.bernoulli(k4, 0.3, (2, 1, 48, 48)).astype(jnp.float32)
    loss2 = iou_loss(pred2, target2)
    jax.block_until_ready(loss2)
    ref2 = _iou_ref(pred2, target2)
    assert np.allclose(np.asarray(loss2), np.asarray(ref2), rtol=1e-5, atol=1e-6), (loss2, ref2)

    # Case 3: batch of 1 with an odd tile count -> exercises the clamped
    # fully-out-of-bounds tile on the second pixel half.
    loss3 = iou_loss(pred2[:1], target2[:1], tile_rows=8)
    jax.block_until_ready(loss3)
    ref3 = _iou_ref(pred2[:1], target2[:1])
    assert np.allclose(np.asarray(loss3), np.asarray(ref3), rtol=1e-5, atol=1e-6), (loss3, ref3)

    print("KERNEL_OK")
</pallas_src>

<mosaic_0001>
module attributes {stable_mosaic.version = 11 : i64} {
  func.func @_iou_sums_kernel(%arg0: i32, %arg1: i32, %arg2: i32, %arg3: memref<1x8x128xf32, #tpu.memory_space<vmem>>, %arg4: memref<1x8x128xf32, #tpu.memory_space<vmem>>, %arg5: memref<1x1x1x1xf32, #tpu.memory_space<vmem>>, %arg6: memref<1x1x1x1xf32, #tpu.memory_space<vmem>>, %arg7: memref<8x128xf32, #tpu.memory_space<vmem>>, %arg8: memref<8x128xf32, #tpu.memory_space<vmem>>) attributes {dimension_semantics = [#tpu.dimension_semantics<parallel>, #tpu.dimension_semantics<parallel>, #tpu.dimension_semantics<arbitrary>], iteration_bounds = array<i64: 2, 1, 1>, scalar_prefetch = 0 : i64, scratch_operands = 2 : i64, tpu.core_type = #tpu.core_type<tc>, window_params = [{transform_indices = @transform_0, window_bounds = array<i64: 1, 8, 128>}, {transform_indices = @transform_1, window_bounds = array<i64: 1, 8, 128>}, {transform_indices = @transform_2, window_bounds = array<i64: 1, 1, 1, 1>}, {transform_indices = @transform_3, window_bounds = array<i64: 1, 1, 1, 1>}]} {
    %c0_i32 = arith.constant 0 : i32
    %0 = arith.cmpi eq, %arg2, %c0_i32 : i32
    %1 = arith.extui %0 : i1 to i32
    %c0_i32_0 = arith.constant 0 : i32
    %2 = arith.cmpi ne, %1, %c0_i32_0 : i32
    scf.if %2 {
      %cst_17 = arith.constant 0.000000e+00 : f32
      %22 = vector.broadcast %cst_17 : f32 to vector<8x128xf32>
      %c0_18 = arith.constant 0 : index
      %c0_19 = arith.constant 0 : index
      %23 = vector.load %arg7[%c0_18, %c0_19] : memref<8x128xf32, #tpu.memory_space<vmem>>, vector<8x128xf32>
      tpu.vector_store %arg7[%c0_18, %c0_19], %22 {strides = array<i32>} : memref<8x128xf32, #tpu.memory_space<vmem>>, vector<8x128xf32>,
      %cst_20 = arith.constant 0.000000e+00 : f32
      %24 = vector.broadcast %cst_20 : f32 to vector<8x128xf32>
      %c0_21 = arith.constant 0 : index
      %c0_22 = arith.constant 0 : index
      %25 = vector.load %arg8[%c0_21, %c0_22] : memref<8x128xf32, #tpu.memory_space<vmem>>, vector<8x128xf32>
      tpu.vector_store %arg8[%c0_21, %c0_22], %24 {strides = array<i32>} : memref<8x128xf32, #tpu.memory_space<vmem>>, vector<8x128xf32>,
    } else {
    }
    %c0 = arith.constant 0 : index
    %c0_1 = arith.constant 0 : index
    %c0_2 = arith.constant 0 : index
    %3 = vector.load %arg3[%c0, %c0_1, %c0_2] : memref<1x8x128xf32, #tpu.memory_space<vmem>>, vector<1x8x128xf32>
    %4 = vector.shape_cast %3 : vector<1x8x128xf32> to vector<8x128xf32>
    %c0_3 = arith.constant 0 : index
    %c0_4 = arith.constant 0 : index
    %c0_5 = arith.constant 0 : index
    %5 = vector.load %arg4[%c0_3, %c0_4, %c0_5] : memref<1x8x128xf32, #tpu.memory_space<vmem>>, vector<1x8x128xf32>
    %6 = vector.shape_cast %5 : vector<1x8x128xf32> to vector<8x128xf32>
    %7 = arith.mulf %4, %6 : vector<8x128xf32>
    %8 = vector.shape_cast %7 : vector<8x128xf32> to vector<1x8x128xf32>
    %cst = arith.constant dense<0.000000e+00> : vector<8x128xf32>
    %9 = vector.multi_reduction <add>, %8, %cst [0] : vector<1x8x128xf32> to vector<8x128xf32>
    %10 = arith.addf %4, %6 : vector<8x128xf32>
    %11 = vector.shape_cast %10 : vector<8x128xf32> to vector<1x8x128xf32>
    %cst_6 = arith.constant dense<0.000000e+00> : vector<8x128xf32>
    %12 = vector.multi_reduction <add>, %11, %cst_6 [0] : vector<1x8x128xf32> to vector<8x128xf32>
    %c0_7 = arith.constant 0 : index
    %c0_8 = arith.constant 0 : index
    %13 = vector.load %arg7[%c0_7, %c0_8] : memref<8x128xf32, #tpu.memory_space<vmem>>, vector<8x128xf32>
    %14 = arith.addf %13, %9 : vector<8x128xf32>
    %c0_9 = arith.constant 0 : index
    %c0_10 = arith.constant 0 : index
    %15 = vector.load %arg7[%c0_9, %c0_10] : memref<8x128xf32, #tpu.memory_space<vmem>>, vector<8x128xf32>
    tpu.vector_store %arg7[%c0_9, %c0_10], %14 {strides = array<i32>} : memref<8x128xf32, #tpu.memory_space<vmem>>, vector<8x128xf32>,
    %c0_11 = arith.constant 0 : index
    %c0_12 = arith.constant 0 : index
    %16 = vector.load %arg8[%c0_11, %c0_12] : memref<8x128xf32, #tpu.memory_space<vmem>>, vector<8x128xf32>
    %17 = arith.addf %16, %12 : vector<8x128xf32>
    %c0_13 = arith.constant 0 : index
    %c0_14 = arith.constant 0 : index
    %18 = vector.load %arg8[%c0_13, %c0_14] : memref<8x128xf32, #tpu.memory_space<vmem>>, vector<8x128xf32>
    tpu.vector_store %arg8[%c0_13, %c0_14], %17 {strides = array<i32>} : memref<8x128xf32, #tpu.memory_space<vmem>>, vector<8x128xf32>,
    %c0_i32_15 = arith.constant 0 : i32
    %19 = arith.cmpi eq, %arg2, %c0_i32_15 : i32
    %20 = arith.extui %19 : i1 to i32
    %c0_i32_16 = arith.constant 0 : i32
    %21 = arith.cmpi ne, %20, %c0_i32_16 : i32
    scf.if %21 {
      %cst_17 = arith.constant 0.000000e+00 : f32
      %22 = vector.broadcast %cst_17 : f32 to vector<1x1x1x1xf32>
      %c0_18 = arith.constant 0 : index
      %c0_19 = arith.constant 0 : index
      %23 = vector.load %arg7[%c0_18, %c0_19] : memref<8x128xf32, #tpu.memory_space<vmem>>, vector<8x128xf32>
      %24 = vector.shape_cast %23 : vector<8x128xf32> to vector<1x8x128xf32>
      %cst_20 = arith.constant dense<0.000000e+00> : vector<1xf32>
      %25 = vector.multi_reduction <add>, %24, %cst_20 [1, 2] : vector<1x8x128xf32> to vector<1xf32>
      %26 = vector.shape_cast %25 : vector<1xf32> to vector<1x1x1xf32>
      %27 = vector.extract %26[0, 0, 0] : f32 from vector<1x1x1xf32>
      %28 = vector.broadcast %27 : f32 to vector<1x1x1x1xf32>
      %29 = arith.addf %22, %28 : vector<1x1x1x1xf32>
      %c0_21 = arith.constant 0 : index
      %c0_22 = arith.constant 0 : index
      %c0_23 = arith.constant 0 : index
      %c0_24 = arith.constant 0 : index
      %30 = vector.load %arg5[%c0_21, %c0_22, %c0_23, %c0_24] : memref<1x1x1x1xf32, #tpu.memory_space<vmem>>, vector<1x1x1x1xf32>
      tpu.vector_store %arg5[%c0_21, %c0_22, %c0_23, %c0_24], %29 {strides = array<i32>} : memref<1x1x1x1xf32, #tpu.memory_space<vmem>>, vector<1x1x1x1xf32>,
      %cst_25 = arith.constant 0.000000e+00 : f32
      %31 = vector.broadcast %cst_25 : f32 to vector<1x1x1x1xf32>
      %c0_26 = arith.constant 0 : index
      %c0_27 = arith.constant 0 : index
      %32 = vector.load %arg8[%c0_26, %c0_27] : memref<8x128xf32, #tpu.memory_space<vmem>>, vector<8x128xf32>
      %33 = vector.shape_cast %32 : vector<8x128xf32> to vector<1x8x128xf32>
      %cst_28 = arith.constant dense<0.000000e+00> : vector<1xf32>
      %34 = vector.multi_reduction <add>, %33, %cst_28 [1, 2] : vector<1x8x128xf32> to vector<1xf32>
      %35 = vector.shape_cast %34 : vector<1xf32> to vector<1x1x1xf32>
      %36 = vector.extract %35[0, 0, 0] : f32 from vector<1x1x1xf32>
      %37 = vector.broadcast %36 : f32 to vector<1x1x1x1xf32>
      %38 = arith.addf %31, %37 : vector<1x1x1x1xf32>
      %c0_29 = arith.constant 0 : index
      %c0_30 = arith.constant 0 : index
      %c0_31 = arith.constant 0 : index
      %c0_32 = arith.constant 0 : index
      %39 = vector.load %arg6[%c0_29, %c0_30, %c0_31, %c0_32] : memref<1x1x1x1xf32, #tpu.memory_space<vmem>>, vector<1x1x1x1xf32>
      tpu.vector_store %arg6[%c0_29, %c0_30, %c0_31, %c0_32], %38 {strides = array<i32>} : memref<1x1x1x1xf32, #tpu.memory_space<vmem>>, vector<1x1x1x1xf32>,
    } else {
    }
    return
  }
  func.func @transform_0(%arg0: i32, %arg1: i32, %arg2: i32) -> (i32, i32, i32) {
    %c1_i32 = arith.constant 1 : i32
    %0 = arith.muli %arg1, %c1_i32 : i32
    %1 = arith.addi %0, %arg2 : i32
    %c0_i32 = arith.constant 0 : i32
    %2 = arith.minsi %1, %c0_i32 : i32
    %c0_i32_0 = arith.constant 0 : i32
    %c0_i32_1 = arith.constant 0 : i32
    return %arg0, %2, %c0_i32_0 : i32, i32, i32
  }
  func.func @transform_1(%arg0: i32, %arg1: i32, %arg2: i32) -> (i32, i32, i32) {
    %c1_i32 = arith.constant 1 : i32
    %0 = arith.muli %arg1, %c1_i32 : i32
    %1 = arith.addi %0, %arg2 : i32
    %c0_i32 = arith.constant 0 : i32
    %2 = arith.minsi %1, %c0_i32 : i32
    %c0_i32_0 = arith.constant 0 : i32
    %c0_i32_1 = arith.constant 0 : i32
    return %arg0, %2, %c0_i32_0 : i32, i32, i32
  }
  func.func @transform_2(%arg0: i32, %arg1: i32, %arg2: i32) -> (i32, i32, i32, i32) {
    %c0_i32 = arith.constant 0 : i32
    %c0_i32_0 = arith.constant 0 : i32
    %c0_i32_1 = arith.constant 0 : i32
    return %arg0, %arg1, %c0_i32, %c0_i32_0 : i32, i32, i32, i32
  }
  func.func @transform_3(%arg0: i32, %arg1: i32, %arg2: i32) -> (i32, i32, i32, i32) {
    %c0_i32 = arith.constant 0 : i32
    %c0_i32_0 = arith.constant 0 : i32
    %c0_i32_1 = arith.constant 0 : i32
    return %arg0, %arg1, %c0_i32, %c0_i32_0 : i32, i32, i32, i32
  }
}

</mosaic_0001>

<llo_original>
// kernel: iou_loss.1
$region0: #{iou_loss.1}
  #allocation0 [shape = 'u32[]', space=smem, size = 0x4, offset = 0x4, fixed_abs, tag = 'smem constant byte address 0x4 - core index']
  #allocation1 [shape = 'u32[144,128]{1,0:T(1,128)}', space=vmem, size = 0x12000, scoped, tag = 'internal scratch']
  #allocation2 [shape = 'f32[8,128]{1,0:T(8,128)}', space=vmem, size = 0x1000, scoped, tag = 'scratch operand']
  #allocation3 [shape = 'f32[8,128]{1,0:T(8,128)}', space=vmem, size = 0x1000, scoped, tag = 'scratch operand']
  %s0 = inlined_call_operand.vmem [shape: f32[2,8,128], index: 0, kind: input, shape index: {}]
  %s1 = inlined_call_operand.vmem [shape: f32[2,8,128], index: 1, kind: input, shape index: {}]
  %s2 = inlined_call_operand.vmem [shape: f32[2,1,1,1], index: 2, kind: output, shape index: {0}]
  %s3 = inlined_call_operand.vmem [shape: f32[2,1,1,1], index: 3, kind: output, shape index: {1}]
  %4 = xla_tuple %s2, %s3
  %s5 = sld [smem:[#allocation0]]
  $region57: #{iou_loss.1} parent=0
    _
  %s7 = ssub.s32 1, %s5
  %s8 = scalar_select 0, %s7, %s5
  loop: start=0, step=1, limit=4
  $region2: #{iou_loss.1} parent=0 // loop_pre_header
    _
  $region3: #{iou_loss.1} parent=0 // loop_header
    %s10 = sphi 0, %s14
    %p11 = scmp.ge.s32.totalorder %s10, 4
    %s17 = sphi 0, %s36
    %s18 = sphi 0, %s32
    %s19 = sphi 0, %s28
    %s20 = sphi 0, %s17
    %s21 = sphi 0, %s18
    %s22 = sphi 0, %s19
    %s23 = sphi 0, %s20
    %s24 = sphi 0, %s21
    %s25 = sphi 0, %s22
    %s47 = sphi 0, %s49
    %s50 = sphi 0, %s47
    %s51 = sphi 0, %s50
    %s67 = sphi 0, %s51
    %s81 = sphi 0, %s83
    %s84 = sphi 0, %s81
    %s85 = sphi 0, %s84
    %s101 = sphi 0, %s85
    %s109 = sphi 0, %s111
    %s112 = sphi 0, %s109
    %s113 = sphi 0, %s112
    %s129 = sphi 0, %s113
    %s137 = sphi 0, %s139
    %s140 = sphi 0, %s137
    %s141 = sphi 0, %s140
    %s157 = sphi 0, %s141
  $region4: #{iou_loss.1} parent=0 // loop_header_branch
    %13 = sbr.rel (%p11) target = $region8
  $region5: #{iou_loss.1} parent=0 // loop_body
    %s15 = ssub.s32 %s10, 1
    %s16 = ssub.s32 %s10, 2
    %s26 = sadd.s32 1, %s19
    %p27 = scmp.ge.s32.totalorder %s26, 1
    %s28 = scalar_select %p27, 0, %s26
    %s29 = sadd.s32 1, %s18
    %s30 = scalar_select %p27, %s29, %s18
    %p31 = scmp.ge.s32.totalorder %s30, 1
    %s32 = scalar_select %p31, 0, %s30
    %s33 = sadd.s32 1, %s17
    %s34 = scalar_select %p31, %s33, %s17
    %p35 = scmp.ge.s32.totalorder %s34, 2
    %s36 = scalar_select %p35, 0, %s34
    %s37 = sadd.s32 %s18, %s19
    %p38 = scmp.lt.s32.totalorder %s37, 0
    %s39 = scalar_select %p38, %s37, 0
    %s40 = sadd.s32 %s32, %s28
    %p41 = scmp.lt.s32.totalorder %s40, 0
    %s42 = scalar_select %p41, %s40, 0
    %s43 = ssub.s32 %s17, %s36
    %s44 = ssub.s32 %s39, %s42
    %s45 = sor.u32 %s43, %s44
    %p46 = scmp.eq.s32.totalorder %s45, 0
    %s48 = sadd.s32 %s47, 1
    %s49 = scalar_select %p46, %s47, %s48
    %p52 = pneg %p46
    %p53 = scmp.eq.s32.totalorder %s10, 1
    %p54 = por %p52, %p53
    %p55 = scmp.ne.s32.totalorder %s47, %s50
    %p56 = scmp.eq.s32.totalorder %s10, 0
    %p57 = por %p55, %p56
    %p58 = scmp.ne.s32.totalorder %s47, %s50
    %p59 = scmp.eq.s32.totalorder %s15, 1
    %p60 = por %p58, %p59
    %p61 = scmp.ne.s32.totalorder %s50, %s51
    %p62 = scmp.eq.s32.totalorder %s15, 0
    %p63 = por %p61, %p62
    %p64 = scmp.ne.s32.totalorder %s50, %s51
    %p65 = scmp.eq.s32.totalorder %s16, 1
    %p66 = por %p64, %p65
    %p68 = scmp.ne.s32.totalorder %s51, %s67
    %p69 = scmp.eq.s32.totalorder %s16, 0
    %p70 = por %p68, %p69
    %s71 = sadd.s32 %s18, %s19
    %p72 = scmp.lt.s32.totalorder %s71, 0
    %s73 = scalar_select %p72, %s71, 0
    %s74 = sadd.s32 %s32, %s28
    %p75 = scmp.lt.s32.totalorder %s74, 0
    %s76 = scalar_select %p75, %s74, 0
    %s77 = ssub.s32 %s17, %s36
    %s78 = ssub.s32 %s73, %s76
    %s79 = sor.u32 %s77, %s78
    %p80 = scmp.eq.s32.totalorder %s79, 0
    %s82 = sadd.s32 %s81, 1
    %s83 = scalar_select %p80, %s81, %s82
    %p86 = pneg %p80
    %p87 = scmp.eq.s32.totalorder %s10, 1
    %p88 = por %p86, %p87
    %p89 = scmp.ne.s32.totalorder %s81, %s84
    %p90 = scmp.eq.s32.totalorder %s10, 0
    %p91 = por %p89, %p90
    %p92 = scmp.ne.s32.totalorder %s81, %s84
    %p93 = scmp.eq.s32.totalorder %s15, 1
    %p94 = por %p92, %p93
    %p95 = scmp.ne.s32.totalorder %s84, %s85
    %p96 = scmp.eq.s32.totalorder %s15, 0
    %p97 = por %p95, %p96
    %p98 = scmp.ne.s32.totalorder %s84, %s85
    %p99 = scmp.eq.s32.totalorder %s16, 1
    %p100 = por %p98, %p99
    %p102 = scmp.ne.s32.totalorder %s85, %s101
    %p103 = scmp.eq.s32.totalorder %s16, 0
    %p104 = por %p102, %p103
    %s105 = ssub.s32 %s17, %s36
    %s106 = ssub.s32 %s18, %s32
    %s107 = sor.u32 %s105, %s106
    %p108 = scmp.eq.s32.totalorder %s107, 0
    %s110 = sadd.s32 %s109, 1
    %s111 = scalar_select %p108, %s109, %s110
    %p114 = pneg %p108
    %p115 = scmp.eq.s32.totalorder %s10, 1
    %p116 = por %p114, %p115
    %p117 = scmp.ne.s32.totalorder %s109, %s112
    %p118 = scmp.eq.s32.totalorder %s10, 0
    %p119 = por %p117, %p118
    %p120 = scmp.ne.s32.totalorder %s109, %s112
    %p121 = scmp.eq.s32.totalorder %s15, 1
    %p122 = por %p120, %p121
    %p123 = scmp.ne.s32.totalorder %s112, %s113
    %p124 = scmp.eq.s32.totalorder %s15, 0
    %p125 = por %p123, %p124
    %p126 = scmp.ne.s32.totalorder %s112, %s113
    %p127 = scmp.eq.s32.totalorder %s16, 1
    %p128 = por %p126, %p127
    %p130 = scmp.ne.s32.totalorder %s113, %s129
    %p131 = scmp.eq.s32.totalorder %s16, 0
    %p132 = por %p130, %p131
    %s133 = ssub.s32 %s17, %s36
    %s134 = ssub.s32 %s18, %s32
    %s135 = sor.u32 %s133, %s134
    %p136 = scmp.eq.s32.totalorder %s135, 0
    %s138 = sadd.s32 %s137, 1
    %s139 = scalar_select %p136, %s137, %s138
    %p142 = pneg %p136
    %p143 = scmp.eq.s32.totalorder %s10, 1
    %p144 = por %p142, %p143
    %p145 = scmp.ne.s32.totalorder %s137, %s140
    %p146 = scmp.eq.s32.totalorder %s10, 0
    %p147 = por %p145, %p146
    %p148 = scmp.ne.s32.totalorder %s137, %s140
    %p149 = scmp.eq.s32.totalorder %s15, 1
    %p150 = por %p148, %p149
    %p151 = scmp.ne.s32.totalorder %s140, %s141
    %p152 = scmp.eq.s32.totalorder %s15, 0
    %p153 = por %p151, %p152
    %p154 = scmp.ne.s32.totalorder %s140, %s141
    %p155 = scmp.eq.s32.totalorder %s16, 1
    %p156 = por %p154, %p155
    %p158 = scmp.ne.s32.totalorder %s141, %s157
    %p159 = scmp.eq.s32.totalorder %s16, 0
    %p160 = por %p158, %p159
    %p161 = scmp.le.s32.totalorder 1, %s10
    %p162 = scmp.lt.s32.totalorder %s10, 3
    %p163 = pnand %p161, %p162
    %p164 = pneg %p163
    // Predicated region
    $region9: #{iou_loss.1} parent=5 // pred_check
      _
    $region10: #{iou_loss.1} parent=5 // pred_check_branch
      %166 = sbr.rel (%p163) target = $region12
    $region11: #{iou_loss.1} parent=5 // pred_region
      %s167 = ssub.s32 %s10, 1
    $region12: #{iou_loss.1} parent=5 // pred_fallthru
      _
    %p168 = scmp.lt.s32.totalorder %s10, 2
    // Predicated region
    $region13: #{iou_loss.1} parent=5 // pred_check
      %p169 = pneg %p168
    $region14: #{iou_loss.1} parent=5 // pred_check_branch
      %171 = sbr.rel (%p169) target = $region16
    $region15: #{iou_loss.1} parent=5 // pred_region
      // Predicated region
      $region17: #{iou_loss.1} parent=15 // pred_check
        %p172 = pneg %p57
      $region18: #{iou_loss.1} parent=15 // pred_check_branch
        %174 = sbr.rel (%p172) target = $region20
      $region19: #{iou_loss.1} parent=15 // pred_region
        %s175 = sadd.s32 %s18, %s19
        %p176 = scmp.lt.s32.totalorder %s175, 0
        %s177 = scalar_select %p176, %s175, 0
        %p178 = scmp.lt.s32.totalorder %s17, 1
        %s179 = scalar_select %p178, %s17, 1
        %p180 = scmp.lt.s32.totalorder %s177, 0
        %s181 = scalar_select %p180, %s177, 0
        %s182 = sadd.s32 %s181, %s179
        %s183 = smul.addr %s182, 8
        %s184 = scalar_lea.vmem %s0, %s183
        %s185 = sadd.s32 %s18, %s19
        %p186 = scmp.lt.s32.totalorder %s185, 0
        %s187 = scalar_select %p186, %s185, 0
      $region20: #{iou_loss.1} parent=15 // pred_fallthru
        _
      // Predicated region
      $region21: #{iou_loss.1} parent=15 // pred_check
        %p188 = pneg %p91
      $region22: #{iou_loss.1} parent=15 // pred_check_branch
        %190 = sbr.rel (%p188) target = $region24
      $region23: #{iou_loss.1} parent=15 // pred_region
        %s191 = sadd.s32 %s18, %s19
        %p192 = scmp.lt.s32.totalorder %s191, 0
        %s193 = scalar_select %p192, %s191, 0
        %p194 = scmp.lt.s32.totalorder %s17, 1
        %s195 = scalar_select %p194, %s17, 1
        %p196 = scmp.lt.s32.totalorder %s193, 0
        %s197 = scalar_select %p196, %s193, 0
        %s198 = sadd.s32 %s197, %s195
        %s199 = smul.addr %s198, 8
        %s200 = scalar_lea.vmem %s1, %s199
        %s201 = sadd.s32 %s18, %s19
        %p202 = scmp.lt.s32.totalorder %s201, 0
        %s203 = scalar_select %p202, %s201, 0
      $region24: #{iou_loss.1} parent=15 // pred_fallthru
        _
    $region16: #{iou_loss.1} parent=5 // pred_fallthru
      _
    %p204 = scmp.le.s32.totalorder 1, %s10
    %p205 = scmp.lt.s32.totalorder %s10, 3
    %p206 = pnand %p204, %p205
    %p207 = pneg %p206
    // Predicated region
    $region25: #{iou_loss.1} parent=5 // pred_check
      _
    $region26: #{iou_loss.1} parent=5 // pred_check_branch
      %209 = sbr.rel (%p206) target = $region28
    $region27: #{iou_loss.1} parent=5 // pred_region
      %s210 = ssub.s32 %s10, 1
      %s211 = sadd.s32 %s21, %s22
      %p212 = scmp.lt.s32.totalorder %s211, 0
      %s213 = scalar_select %p212, %s211, 0
      %p214 = scmp.lt.s32.totalorder %s20, 1
      %s215 = scalar_select %p214, %s20, 1
      %p216 = scmp.lt.s32.totalorder %s213, 0
      %s217 = scalar_select %p216, %s213, 0
      %s218 = sadd.s32 %s217, %s215
      %s219 = smul.addr %s218, 8
      %s220 = scalar_lea.vmem %s0, %s219
      %p221 = pneg %p63
      %p222 = pneg %p60
      %s223 = sadd.s32 %s21, %s22
      %p224 = scmp.lt.s32.totalorder %s223, 0
      %s225 = scalar_select %p224, %s223, 0
      %p226 = scmp.lt.s32.totalorder %s20, 1
      %s227 = scalar_select %p226, %s20, 1
      %p228 = scmp.lt.s32.totalorder %s225, 0
      %s229 = scalar_select %p228, %s225, 0
      %s230 = sadd.s32 %s229, %s227
      %s231 = smul.addr %s230, 8
      %s232 = scalar_lea.vmem %s1, %s231
      %p233 = pneg %p97
      %p234 = pneg %p94
      %p235 = pneg %p125
      %p236 = pneg %p122
      %p237 = scmp.lt.s32.totalorder %s20, 1
      %s238 = scalar_select %p237, %s20, 1
      %p239 = scmp.lt.s32.totalorder %s21, 0
      %s240 = scalar_select %p239, %s21, 0
      %s241 = sadd.s32 %s240, %s238
      %s242 = scalar_lea.vmem %s2, %s241
      %p243 = pneg %p153
      %p244 = pneg %p150
      %p245 = scmp.lt.s32.totalorder %s20, 1
      %s246 = scalar_select %p245, %s20, 1
      %p247 = scmp.lt.s32.totalorder %s21, 0
      %s248 = scalar_select %p247, %s21, 0
      %s249 = sadd.s32 %s248, %s246
      %s250 = scalar_lea.vmem %s3, %s249
      %s251 = sadd.s32 %s21, %s22
      %p252 = scmp.lt.s32.totalorder %s251, 0
      %s253 = scalar_select %p252, %s251, 0
      %p254 = scmp.lt.s32.totalorder %s20, 1
      %s255 = scalar_select %p254, %s20, 1
      %p256 = scmp.lt.s32.totalorder %s253, 0
      %s257 = scalar_select %p256, %s253, 0
      %s258 = sadd.s32 %s257, %s255
      %s259 = smul.addr %s258, 8
      %s260 = scalar_lea.vmem %s0, %s259
      %s261 = sadd.s32 %s21, %s22
      %p262 = scmp.lt.s32.totalorder %s261, 0
      %s263 = scalar_select %p262, %s261, 0
      %s264 = sadd.s32 %s21, %s22
      %p265 = scmp.lt.s32.totalorder %s264, 0
      %s266 = scalar_select %p265, %s264, 0
      %p267 = scmp.lt.s32.totalorder %s20, 1
      %s268 = scalar_select %p267, %s20, 1
      %p269 = scmp.lt.s32.totalorder %s266, 0
      %s270 = scalar_select %p269, %s266, 0
      %s271 = sadd.s32 %s270, %s268
      %s272 = smul.addr %s271, 8
      %s273 = scalar_lea.vmem %s1, %s272
      %s274 = sadd.s32 %s21, %s22
      %p275 = scmp.lt.s32.totalorder %s274, 0
      %s276 = scalar_select %p275, %s274, 0
      %p277 = scmp.lt.s32.totalorder %s20, 1
      %s278 = scalar_select %p277, %s20, 1
      %p279 = scmp.lt.s32.totalorder %s21, 0
      %s280 = scalar_select %p279, %s21, 0
      %s281 = sadd.s32 %s280, %s278
      %s282 = scalar_lea.vmem %s2, %s281
      %p283 = scmp.lt.s32.totalorder %s20, 1
      %s284 = scalar_select %p283, %s20, 1
      %p285 = scmp.lt.s32.totalorder %s21, 0
      %s286 = scalar_select %p285, %s21, 0
      %s287 = sadd.s32 %s286, %s284
      %s288 = scalar_lea.vmem %s3, %s287
      %p289 = scmp.eq.s32.totalorder %s22, 0
      // Predicated region
      $region29: #{iou_loss.1} parent=27 // pred_check
        %p290 = pneg %p289
      $region30: #{iou_loss.1} parent=27 // pred_check_branch
        %292 = sbr.rel (%p290) target = $region32
      $region31: #{iou_loss.1} parent=27 // pred_region
        %293 = vst [vmem:[#allocation2] sm:$0xff] 0.0
        %294 = vst [vmem:[#allocation3] sm:$0xff] 0.0
      $region32: #{iou_loss.1} parent=27 // pred_fallthru
        _
      %v295 = vld [vmem:[%s260] sm:$0xff]
      %v296 = vld [vmem:[%s273] sm:$0xff]
      %v297 = vmul.f32 %v295, %v296
      %v298 = vadd.f32 %v297, 0.0
      %v299 = vadd.f32 %v295, %v296
      %v300 = vadd.f32 %v299, 0.0
      %v301 = vld [vmem:[#allocation2] sm:$0xff]
      %v302 = vadd.f32 %v301, %v298
      %303 = vst [vmem:[#allocation2] sm:$0xff] %v302
      %v304 = vld [vmem:[#allocation3] sm:$0xff]
      %v305 = vadd.f32 %v304, %v300
      %306 = vst [vmem:[#allocation3] sm:$0xff] %v305
      // Predicated region
      $region33: #{iou_loss.1} parent=27 // pred_check
        %p307 = pneg %p289
      $region34: #{iou_loss.1} parent=27 // pred_check_branch
        %309 = sbr.rel (%p307) target = $region36
      $region35: #{iou_loss.1} parent=27 // pred_region
        %v310 = vld [vmem:[#allocation2] sm:$0xff]
        %311 = vadd.xlane.f32.xlu0 %v310
        %v312 = vpop.xlane.xlu0 %311
        %v313 = vrot.slane %v312, 4
        %v314 = vadd.f32 %v312, %v313
        %v315 = vrot.slane %v314, 2
        %v316 = vadd.f32 %v314, %v315
        %v317 = vrot.slane %v316, 1
        %v318 = vadd.f32 %v316, %v317
        %s319 = vtos %v318
        %v320 = vstv %s319
        %v321 = vadd.f32 %v320, 0.0
        %vm322 = vcmask 0
        %323 = vst.msk [vmem:[%s282] sm:$0x1] %vm322, %v321
        %v324 = vld [vmem:[#allocation3] sm:$0xff]
        %325 = vadd.xlane.f32.xlu0 %v324
        %v326 = vpop.xlane.xlu0 %325
        %v327 = vrot.slane %v326, 4
        %v328 = vadd.f32 %v326, %v327
        %v329 = vrot.slane %v328, 2
        %v330 = vadd.f32 %v328, %v329
        %v331 = vrot.slane %v330, 1
        %v332 = vadd.f32 %v330, %v331
        %s333 = vtos %v332
        %v334 = vstv %s333
        %v335 = vadd.f32 %v334, 0.0
        %336 = vst.msk [vmem:[%s288] sm:$0x1] %vm322, %v335
      $region36: #{iou_loss.1} parent=27 // pred_fallthru
        _
      %p337 = scmp.lt.s32.totalorder %s20, 1
      %s338 = scalar_select %p337, %s20, 1
      %p339 = scmp.lt.s32.totalorder %s21, 0
      %s340 = scalar_select %p339, %s21, 0
      %s341 = sadd.s32 %s340, %s338
      %s342 = scalar_lea.vmem %s2, %s341
      %p343 = scmp.lt.s32.totalorder %s20, 1
      %s344 = scalar_select %p343, %s20, 1
      %p345 = scmp.lt.s32.totalorder %s21, 0
      %s346 = scalar_select %p345, %s21, 0
      %s347 = sadd.s32 %s346, %s344
      %s348 = scalar_lea.vmem %s3, %s347
      // Predicated region
      $region37: #{iou_loss.1} parent=27 // pred_check
        %p349 = pneg %p122
      $region38: #{iou_loss.1} parent=27 // pred_check_branch
        %351 = sbr.rel (%p349) target = $region40
      $region39: #{iou_loss.1} parent=27 // pred_region
        _
      $region40: #{iou_loss.1} parent=27 // pred_fallthru
        _
      // Predicated region
      $region41: #{iou_loss.1} parent=27 // pred_check
        %p352 = pneg %p150
      $region42: #{iou_loss.1} parent=27 // pred_check_branch
        %354 = sbr.rel (%p352) target = $region44
      $region43: #{iou_loss.1} parent=27 // pred_region
        _
      $region44: #{iou_loss.1} parent=27 // pred_fallthru
        _
    $region28: #{iou_loss.1} parent=5 // pred_fallthru
      _
    %p355 = scmp.le.s32.totalorder 2, %s10
    // Predicated region
    $region45: #{iou_loss.1} parent=5 // pred_check
      %p356 = pneg %p355
    $region46: #{iou_loss.1} parent=5 // pred_check_branch
      %358 = sbr.rel (%p356) target = $region48
    $region47: #{iou_loss.1} parent=5 // pred_region
      %s359 = ssub.s32 %s10, 2
      // Predicated region
      $region49: #{iou_loss.1} parent=47 // pred_check
        %p360 = pneg %p128
      $region50: #{iou_loss.1} parent=47 // pred_check_branch
        %362 = sbr.rel (%p360) target = $region52
      $region51: #{iou_loss.1} parent=47 // pred_region
        %p363 = scmp.lt.s32.totalorder %s23, 1
        %s364 = scalar_select %p363, %s23, 1
        %p365 = scmp.lt.s32.totalorder %s24, 0
        %s366 = scalar_select %p365, %s24, 0
        %s367 = sadd.s32 %s366, %s364
        %s368 = scalar_lea.vmem %s2, %s367
      $region52: #{iou_loss.1} parent=47 // pred_fallthru
        _
      // Predicated region
      $region53: #{iou_loss.1} parent=47 // pred_check
        %p369 = pneg %p156
      $region54: #{iou_loss.1} parent=47 // pred_check_branch
        %371 = sbr.rel (%p369) target = $region56
      $region55: #{iou_loss.1} parent=47 // pred_region
        %p372 = scmp.lt.s32.totalorder %s23, 1
        %s373 = scalar_select %p372, %s23, 1
        %p374 = scmp.lt.s32.totalorder %s24, 0
        %s375 = scalar_select %p374, %s24, 0
        %s376 = sadd.s32 %s375, %s373
        %s377 = scalar_lea.vmem %s3, %s376
      $region56: #{iou_loss.1} parent=47 // pred_fallthru
        _
    $region48: #{iou_loss.1} parent=5 // pred_fallthru
      _
  $region6: #{iou_loss.1} parent=0 // loop_footer
    %s14 = sadd.s32 1, %s10
  $region7: #{iou_loss.1} parent=0 // loop_footer_branch
    %9 = sbr.rel target = $region3
  $region8: #{iou_loss.1} parent=0 // loop_exit
    _

</llo_original>
